<compile_context>
chip_gen: v7x
topology: tpu7x:2x2x1
jax: 0.10.0
libtpu: 0.0.40
codegen_flags: <defaults>
</compile_context>

<pallas_src>
import functools
import math

import jax
import jax.numpy as jnp
from jax.experimental import pallas as pl
from jax.experimental.pallas import tpu as pltpu

LANE = 128
SUBLANE = 8


def rgcn_kernel(lw_ref, x_ref, adj_ref, w1_ref, w2_ref, w3_ref, out_ref):
    lw0 = lw_ref[0]
    lw1 = lw_ref[1]
    # lw[2] is already folded into W3 by the wrapper (layer 3 has no relu).

    x2d = x_ref[...]          # bf16 (BNp, Fp)   flattened batch*nodes
    adj = adj_ref[...]        # bf16 (BNp, BNp)  block-diagonal adjacency

    # ---- Layer 1: relu(adj @ (x @ W1)) ----
    s1 = jnp.dot(x2d, w1_ref[...], preferred_element_type=jnp.float32)
    x1 = jnp.maximum(
        jnp.dot(adj, s1.astype(jnp.bfloat16), preferred_element_type=jnp.float32),
        0.0)                  # f32 (BNp, Hp)

    # ---- Layer 2: relu(adj @ (x1 @ W2)) ----
    s2 = jnp.dot(x1.astype(jnp.bfloat16), w2_ref[...],
                 preferred_element_type=jnp.float32)
    x2 = jnp.maximum(
        jnp.dot(adj, s2.astype(jnp.bfloat16), preferred_element_type=jnp.float32),
        0.0)                  # f32 (BNp, Hp)

    # Incremental weighted accumulation (shortens x1's live range).
    acc = lw0 * x1

    # ---- Layer 3 (no relu): adj @ (x2 @ (lw2 * W3)) ----
    s3 = jnp.dot(x2.astype(jnp.bfloat16), w3_ref[...],
                 preferred_element_type=jnp.float32)
    acc = acc + lw1 * x2
    x3 = jnp.dot(adj, s3.astype(jnp.bfloat16), preferred_element_type=jnp.float32)

    out_ref[...] = acc + x3


def _pad_to(n, m):
    return ((n + m - 1) // m) * m


def rgcn_forward(x, adj, w1, w2, w3, layer_weights, *, keep_padded_output=False):
    B, N, F = x.shape
    H = w1.shape[1]
    assert adj.shape == (B, N, N)
    assert w2.shape == (H, H)
    assert w3.shape[0] == H
    assert w3.shape[1] == H, "nhid must equal nout for the stack/weighted sum"

    BN = B * N
    BNp = _pad_to(BN, SUBLANE)
    Fp = _pad_to(F, LANE)
    Hp = _pad_to(H, LANE)

    # Flattened + zero-padded activations: (BNp, Fp), bf16 MXU operand.
    x2d = jnp.pad(x.reshape(BN, F), ((0, BNp - BN), (0, Fp - F)))
    x2d = x2d.astype(jnp.bfloat16)

    # Block-diagonal adjacency: adj_bd[(p,i),(q,j)] = (p==q) * adj[p,i,j].
    eye = jnp.eye(B, dtype=adj.dtype)
    adj_bd = jnp.einsum("pq,qij->piqj", eye, adj).reshape(BN, BN)
    adj_bd = jnp.pad(adj_bd, ((0, BNp - BN), (0, BNp - BN))).astype(jnp.bfloat16)

    # Zero-pad weights to lane-dense multiples of 128 (exact: padded rows/cols
    # only ever multiply zeros).  Fold lw[2] into W3 (no relu on layer 3).
    w1_p = jnp.pad(w1, ((0, Fp - F), (0, Hp - H))).astype(jnp.bfloat16)
    w2_p = jnp.pad(w2, ((0, Hp - H), (0, Hp - H))).astype(jnp.bfloat16)
    w3_p = jnp.pad(w3 * layer_weights[0, 2],
                   ((0, Hp - H), (0, Hp - H))).astype(jnp.bfloat16)

    # Layer weights as a flat (3,) f32 SMEM vector (compact SMEM padding).
    lw = layer_weights.reshape(-1).astype(jnp.float32)

    out2d = pl.pallas_call(
        rgcn_kernel,
        out_shape=jax.ShapeDtypeStruct((BNp, Hp), jnp.float32),
        in_specs=[
            pl.BlockSpec(memory_space=pltpu.MemorySpace.SMEM),   # layer_weights
            pl.BlockSpec(memory_space=pltpu.MemorySpace.VMEM),   # x (flattened)
            pl.BlockSpec(memory_space=pltpu.MemorySpace.VMEM),   # adj (block-diag)
            pl.BlockSpec(memory_space=pltpu.MemorySpace.VMEM),   # w1
            pl.BlockSpec(memory_space=pltpu.MemorySpace.VMEM),   # w2
            pl.BlockSpec(memory_space=pltpu.MemorySpace.VMEM),   # w3 (lw2 folded)
        ],
        out_specs=pl.BlockSpec(memory_space=pltpu.MemorySpace.VMEM),
        compiler_params=pltpu.CompilerParams(
            vmem_limit_bytes=32 * 1024 * 1024),
    )(lw, x2d, adj_bd, w1_p, w2_p, w3_p)

    out = out2d[:BN].reshape(B, N, Hp)
    if keep_padded_output:
        # Lane-dense (B, N, Hp) slab; columns >= H are exactly zero.
        return out
    return out[:, :, :H]


def xavier_uniform(key, fan_in, fan_out):
    bound = math.sqrt(6.0 / (fan_in + fan_out))
    return jax.random.uniform(
        key, (fan_in, fan_out), minval=-bound, maxval=bound, dtype=jnp.float32)


def reference_forward(x, adj, w1, w2, w3, layer_weights):
    x1 = jax.nn.relu(jnp.einsum("bij,bjh->bih", adj, jnp.einsum("bid,dh->bih", x, w1)))
    x2 = jax.nn.relu(jnp.einsum("bij,bjh->bih", adj, jnp.einsum("bid,dh->bih", x1, w2)))
    x3 = jnp.einsum("bij,bjh->bih", adj, jnp.einsum("bid,dh->bih", x2, w3))
    stacked = jnp.stack((x1, x2, x3))                       # (3, B, N, H)
    out = jnp.einsum("if,fbnk->ibnk", layer_weights, stacked)
    return jnp.squeeze(out, axis=0)


if __name__ == "__main__":
    # Small shapes consistent with the module: batch=2, N=16 nodes,
    # nfeat=32, nhid=nout=32.
    B, N, NFEAT, NHID, NOUT = 2, 16, 32, 32, 32

    key = jax.random.PRNGKey(0)
    k_x, k_adj, k_w1, k_w2, k_w3, k_lw = jax.random.split(key, 6)

    x = jax.random.normal(k_x, (B, N, NFEAT), dtype=jnp.float32)
    adj = jax.random.uniform(k_adj, (B, N, N), dtype=jnp.float32)

    # Deterministic parameter init (xavier_uniform, matching nn.init).
    w1 = xavier_uniform(k_w1, NFEAT, NHID)
    w2 = xavier_uniform(k_w2, NHID, NHID)
    w3 = xavier_uniform(k_w3, NHID, NOUT)
    # layer_weights (1, num_layers=3); torch leaves it uninitialized, we seed it.
    layer_weights = jax.random.uniform(
        k_lw, (1, 3), minval=-1.0, maxval=1.0, dtype=jnp.float32)

    # Keep the lane-dense padded output inside the jitted path; narrow outside.
    rgcn_jit = jax.jit(functools.partial(rgcn_forward, keep_padded_output=True))
    out_padded = jax.block_until_ready(
        rgcn_jit(x, adj, w1, w2, w3, layer_weights))
    out = out_padded[:, :, :NOUT]

    ref = reference_forward(x, adj, w1, w2, w3, layer_weights)
    assert out_padded.shape[:2] == (B, N)
    assert out.shape == (B, N, NOUT)
    # Padded output columns must be exactly zero.
    assert jnp.max(jnp.abs(out_padded[:, :, NOUT:])) == 0.0
    # bf16 MXU operands (f32 accumulation) -> relative tolerance, not 1e-4.
    err = jnp.max(jnp.abs(out - ref))
    scale = jnp.max(jnp.abs(ref))
    assert err <= 2e-2 * scale + 1e-2, f"mismatch vs reference: err={err}, scale={scale}"

    print("KERNEL_OK")
</pallas_src>

<mosaic_0001>
module attributes {stable_mosaic.version = 11 : i64} {
  func.func @rgcn_kernel(%arg0: memref<3xf32, #tpu.memory_space<smem>>, %arg1: memref<32x128xbf16, #tpu.memory_space<vmem>>, %arg2: memref<32x32xbf16, #tpu.memory_space<vmem>>, %arg3: memref<128x128xbf16, #tpu.memory_space<vmem>>, %arg4: memref<128x128xbf16, #tpu.memory_space<vmem>>, %arg5: memref<128x128xbf16, #tpu.memory_space<vmem>>, %arg6: memref<32x128xf32, #tpu.memory_space<vmem>>) attributes {dimension_semantics = [], scalar_prefetch = 0 : i64, scratch_operands = 0 : i64, tpu.core_type = #tpu.core_type<tc>} {
    %c0 = arith.constant 0 : index
    %0 = memref.load %arg0[%c0] : memref<3xf32, #tpu.memory_space<smem>>
    %c1 = arith.constant 1 : index
    %1 = memref.load %arg0[%c1] : memref<3xf32, #tpu.memory_space<smem>>
    %c0_0 = arith.constant 0 : index
    %c0_1 = arith.constant 0 : index
    %2 = vector.load %arg1[%c0_0, %c0_1] : memref<32x128xbf16, #tpu.memory_space<vmem>>, vector<32x128xbf16>
    %c0_2 = arith.constant 0 : index
    %c0_3 = arith.constant 0 : index
    %3 = vector.load %arg2[%c0_2, %c0_3] : memref<32x32xbf16, #tpu.memory_space<vmem>>, vector<32x32xbf16>
    %c0_4 = arith.constant 0 : index
    %c0_5 = arith.constant 0 : index
    %4 = vector.load %arg3[%c0_4, %c0_5] : memref<128x128xbf16, #tpu.memory_space<vmem>>, vector<128x128xbf16>
    %cst = arith.constant dense<0.000000e+00> : vector<32x128xf32>
    %5 = tpu.matmul %2, %4, %cst {dimension_numbers = #tpu.dot_dimension_numbers<[1], [0], [0], [1], [0, 0, 1, 1], [], []>} : vector<32x128xbf16>, vector<128x128xbf16>, vector<32x128xf32> -> vector<32x128xf32>
    %6 = arith.truncf %5 : vector<32x128xf32> to vector<32x128xbf16>
    %cst_6 = arith.constant dense<0.000000e+00> : vector<32x128xf32>
    %7 = tpu.matmul %3, %6, %cst_6 {dimension_numbers = #tpu.dot_dimension_numbers<[1], [0], [0], [1], [0, 0, 1, 1], [], []>} : vector<32x32xbf16>, vector<32x128xbf16>, vector<32x128xf32> -> vector<32x128xf32>
    %cst_7 = arith.constant 0.000000e+00 : f32
    %8 = vector.broadcast %cst_7 : f32 to vector<32x128xf32>
    %9 = arith.maximumf %7, %8 : vector<32x128xf32>
    %10 = arith.truncf %9 : vector<32x128xf32> to vector<32x128xbf16>
    %c0_8 = arith.constant 0 : index
    %c0_9 = arith.constant 0 : index
    %11 = vector.load %arg4[%c0_8, %c0_9] : memref<128x128xbf16, #tpu.memory_space<vmem>>, vector<128x128xbf16>
    %cst_10 = arith.constant dense<0.000000e+00> : vector<32x128xf32>
    %12 = tpu.matmul %10, %11, %cst_10 {dimension_numbers = #tpu.dot_dimension_numbers<[1], [0], [0], [1], [0, 0, 1, 1], [], []>} : vector<32x128xbf16>, vector<128x128xbf16>, vector<32x128xf32> -> vector<32x128xf32>
    %13 = arith.truncf %12 : vector<32x128xf32> to vector<32x128xbf16>
    %cst_11 = arith.constant dense<0.000000e+00> : vector<32x128xf32>
    %14 = tpu.matmul %3, %13, %cst_11 {dimension_numbers = #tpu.dot_dimension_numbers<[1], [0], [0], [1], [0, 0, 1, 1], [], []>} : vector<32x32xbf16>, vector<32x128xbf16>, vector<32x128xf32> -> vector<32x128xf32>
    %cst_12 = arith.constant 0.000000e+00 : f32
    %15 = vector.broadcast %cst_12 : f32 to vector<32x128xf32>
    %16 = arith.maximumf %14, %15 : vector<32x128xf32>
    %17 = vector.broadcast %0 : f32 to vector<32x128xf32>
    %18 = arith.mulf %17, %9 : vector<32x128xf32>
    %19 = arith.truncf %16 : vector<32x128xf32> to vector<32x128xbf16>
    %c0_13 = arith.constant 0 : index
    %c0_14 = arith.constant 0 : index
    %20 = vector.load %arg5[%c0_13, %c0_14] : memref<128x128xbf16, #tpu.memory_space<vmem>>, vector<128x128xbf16>
    %cst_15 = arith.constant dense<0.000000e+00> : vector<32x128xf32>
    %21 = tpu.matmul %19, %20, %cst_15 {dimension_numbers = #tpu.dot_dimension_numbers<[1], [0], [0], [1], [0, 0, 1, 1], [], []>} : vector<32x128xbf16>, vector<128x128xbf16>, vector<32x128xf32> -> vector<32x128xf32>
    %22 = vector.broadcast %1 : f32 to vector<32x128xf32>
    %23 = arith.mulf %22, %16 : vector<32x128xf32>
    %24 = arith.addf %18, %23 : vector<32x128xf32>
    %25 = arith.truncf %21 : vector<32x128xf32> to vector<32x128xbf16>
    %cst_16 = arith.constant dense<0.000000e+00> : vector<32x128xf32>
    %26 = tpu.matmul %3, %25, %cst_16 {dimension_numbers = #tpu.dot_dimension_numbers<[1], [0], [0], [1], [0, 0, 1, 1], [], []>} : vector<32x32xbf16>, vector<32x128xbf16>, vector<32x128xf32> -> vector<32x128xf32>
    %27 = arith.addf %24, %26 : vector<32x128xf32>
    %c0_17 = arith.constant 0 : index
    %c0_18 = arith.constant 0 : index
    %28 = vector.load %arg6[%c0_17, %c0_18] : memref<32x128xf32, #tpu.memory_space<vmem>>, vector<32x128xf32>
    tpu.vector_store %arg6[%c0_17, %c0_18], %27 {strides = array<i32>} : memref<32x128xf32, #tpu.memory_space<vmem>>, vector<32x128xf32>,
    return
  }
}

</mosaic_0001>

<llo_original>
// kernel: rgcn_forward.1
$region0: #{rgcn_forward.1}
  #allocation0 [shape = 'u32[]', space=smem, size = 0x4, offset = 0x4, fixed_abs, tag = 'smem constant byte address 0x4 - core index']
  #allocation1 [shape = 'u32[144,128]{1,0:T(1,128)}', space=vmem, size = 0x12000, scoped, tag = 'internal scratch']
  %s0 = inlined_call_operand.vmem [shape: f32[3], index: 0, kind: input, shape index: {}]
  %s1 = inlined_call_operand.vmem [shape: bf16[32,128], index: 1, kind: input, shape index: {}]
  %s2 = inlined_call_operand.vmem [shape: bf16[32,32], index: 2, kind: input, shape index: {}]
  %s3 = inlined_call_operand.vmem [shape: bf16[128,128], index: 3, kind: input, shape index: {}]
  %s4 = inlined_call_operand.vmem [shape: bf16[128,128], index: 4, kind: input, shape index: {}]
  %s5 = inlined_call_operand.vmem [shape: bf16[128,128], index: 5, kind: input, shape index: {}]
  %s6 = inlined_call_operand.hbm [shape: f32[32,128], index: 6, kind: output, shape index: {}]
  %s7 = sld [smem:[#allocation0]]
  $region38: #{rgcn_forward.1} parent=0
    _
  %s9 = ssub.s32 1, %s7
  %s10 = scalar_select 0, %s9, %s7
  $region1: #{rgcn_forward.1} parent=0
    #allocation2 [shape = 'u8[512]{0}', space=smem, size = 0x200, scoped, tag = 'input window, operand 0, single buffered']
    #allocation3 [shape = 's32[1]{0}', space=sflag, size = 0x4, scoped, tag = 'scoped memory for rgcn_forward.1']
    #allocation4 [shape = 's32[1]{0}', space=sflag, size = 0x4, scoped, tag = 'scoped memory for rgcn_forward.1']
    #allocation5 [shape = 'u8[16384]{0}', space=vmem, size = 0x4000, scoped, tag = 'output window, operand 0, single buffered']
    %11 = vsyncpa [#allocation4], 0
    %12 = vsyncpa [#allocation3], 0
    // Predicated region
    $region2: #{rgcn_forward.1} parent=1 // pred_check
      _
    $region3: #{rgcn_forward.1} parent=1 // pred_check_branch
      %14 = sbr.rel (0) target = $region5
    $region4: #{rgcn_forward.1} parent=1 // pred_region
      %s16 = ssub.s32 16, 16
      %17 = vsyncadd [#allocation4], %s16
      %s19 = sshll.u32 %s0, 4
      %s20 = int_to_ptr.vmem [resolvable:$true] %s19
      %22 = dma.vmem_to_smem %s20, 16, [#allocation2], [#allocation4]
    $region5: #{rgcn_forward.1} parent=1 // pred_fallthru
      _
    // Predicated region
    $region6: #{rgcn_forward.1} parent=1 // pred_check
      _
    $region7: #{rgcn_forward.1} parent=1 // pred_check_branch
      %24 = sbr.rel (0) target = $region9
    $region8: #{rgcn_forward.1} parent=1 // pred_region
      _
    $region9: #{rgcn_forward.1} parent=1 // pred_fallthru
      _
    // Predicated region
    $region10: #{rgcn_forward.1} parent=1 // pred_check
      _
    $region11: #{rgcn_forward.1} parent=1 // pred_check_branch
      %26 = sbr.rel (0) target = $region13
    $region12: #{rgcn_forward.1} parent=1 // pred_region
      _
    $region13: #{rgcn_forward.1} parent=1 // pred_fallthru
      _
    // Predicated region
    $region14: #{rgcn_forward.1} parent=1 // pred_check
      _
    $region15: #{rgcn_forward.1} parent=1 // pred_check_branch
      %28 = sbr.rel (0) target = $region17
    $region16: #{rgcn_forward.1} parent=1 // pred_region
      _
    $region17: #{rgcn_forward.1} parent=1 // pred_fallthru
      _
    // Predicated region
    $region18: #{rgcn_forward.1} parent=1 // pred_check
      _
    $region19: #{rgcn_forward.1} parent=1 // pred_check_branch
      %30 = sbr.rel (0) target = $region21
    $region20: #{rgcn_forward.1} parent=1 // pred_region
      _
    $region21: #{rgcn_forward.1} parent=1 // pred_fallthru
      _
    // Predicated region
    $region22: #{rgcn_forward.1} parent=1 // pred_check
      _
    $region23: #{rgcn_forward.1} parent=1 // pred_check_branch
      %32 = sbr.rel (0) target = $region25
    $region24: #{rgcn_forward.1} parent=1 // pred_region
      _
    $region25: #{rgcn_forward.1} parent=1 // pred_fallthru
      _
    // Predicated region
    $region26: #{rgcn_forward.1} parent=1 // pred_check
      _
    $region27: #{rgcn_forward.1} parent=1 // pred_check_branch
      %34 = sbr.rel (0) target = $region29
    $region28: #{rgcn_forward.1} parent=1 // pred_region
      %35 = dma.done [#allocation4], 16
    $region29: #{rgcn_forward.1} parent=1 // pred_fallthru
      _
    %36 = sfence
    %s38 = sld [smem:[#allocation2]]
    %s39 = sld [smem:[#allocation2 + $0x1]]
    %v40 = vld [vmem:[%s1] sm:$0xf]
    %v41 = vld [vmem:[%s1 + $0x4] sm:$0xf]
    %v42 = vld [vmem:[%s1 + $0x8] sm:$0xf]
    %v43 = vld [vmem:[%s1 + $0xc] sm:$0xf]
    %v44 = vld [vmem:[%s2] sm:$0xf]
    %v45 = vld [vmem:[%s2 + $0x4] sm:$0xf]
    %v46 = vld [vmem:[%s2 + $0x8] sm:$0xf]
    %v47 = vld [vmem:[%s2 + $0xc] sm:$0xf]
    %v48 = vld [vmem:[%s3] sm:$0xf]
    %v49 = vld [vmem:[%s3 + $0x4] sm:$0xf]
    %v50 = vld [vmem:[%s3 + $0x8] sm:$0xf]
    %v51 = vld [vmem:[%s3 + $0xc] sm:$0xf]
    %v52 = vld [vmem:[%s3 + $0x10] sm:$0xf]
    %v53 = vld [vmem:[%s3 + $0x14] sm:$0xf]
    %v54 = vld [vmem:[%s3 + $0x18] sm:$0xf]
    %v55 = vld [vmem:[%s3 + $0x1c] sm:$0xf]
    %v56 = vld [vmem:[%s3 + $0x20] sm:$0xf]
    %v57 = vld [vmem:[%s3 + $0x24] sm:$0xf]
    %v58 = vld [vmem:[%s3 + $0x28] sm:$0xf]
    %v59 = vld [vmem:[%s3 + $0x2c] sm:$0xf]
    %v60 = vld [vmem:[%s3 + $0x30] sm:$0xf]
    %v61 = vld [vmem:[%s3 + $0x34] sm:$0xf]
    %v62 = vld [vmem:[%s3 + $0x38] sm:$0xf]
    %v63 = vld [vmem:[%s3 + $0x3c] sm:$0xf]
    %v68 = vunpack.c.l.b16 %v40
    %v69 = vunpack.c.l.b16 %v41
    %v70 = vunpack.c.l.b16 %v42
    %v71 = vunpack.c.l.b16 %v43
    %v72 = vpack.c.b16 %v69, %v68
    %v73 = vpack.c.b16 %v71, %v70
    %v92 = vunpack.c.l.b16 %v48
    %v93 = vunpack.c.l.b16 %v49
    %v94 = vunpack.c.l.b16 %v50
    %v95 = vunpack.c.l.b16 %v51
    %v96 = vunpack.c.l.b16 %v52
    %v97 = vunpack.c.l.b16 %v53
    %v98 = vunpack.c.l.b16 %v54
    %v99 = vunpack.c.l.b16 %v55
    %v100 = vunpack.c.l.b16 %v56
    %v101 = vunpack.c.l.b16 %v57
    %v102 = vunpack.c.l.b16 %v58
    %v103 = vunpack.c.l.b16 %v59
    %v104 = vunpack.c.l.b16 %v60
    %v105 = vunpack.c.l.b16 %v61
    %v106 = vunpack.c.l.b16 %v62
    %v107 = vunpack.c.l.b16 %v63
    %v108 = vpack.c.b16 %v93, %v92
    %v109 = vpack.c.b16 %v95, %v94
    %v110 = vpack.c.b16 %v97, %v96
    %v111 = vpack.c.b16 %v99, %v98
    %v112 = vpack.c.b16 %v101, %v100
    %v113 = vpack.c.b16 %v103, %v102
    %v114 = vpack.c.b16 %v105, %v104
    %v115 = vpack.c.b16 %v107, %v106
    %124 = vmatprep.subr.bf16.mxu0 0
    %125 = vmatpush1.bf16.msra.mxu0 %v108
    %126 = vmatprep.subr.bf16.mxu0 0
    %127 = vmatpush1.bf16.msra.mxu0 %v109
    %128 = vmatprep.subr.bf16.mxu0 0
    %129 = vmatpush1.bf16.msra.mxu0 %v110
    %130 = vmatprep.subr.bf16.mxu0 0
    %131 = vmatpush1.bf16.msra.mxu0 %v111
    %132 = vmatprep.subr.bf16.mxu0 0
    %133 = vmatpush1.bf16.msra.mxu0 %v112
    %134 = vmatprep.subr.bf16.mxu0 0
    %135 = vmatpush1.bf16.msra.mxu0 %v113
    %136 = vmatprep.subr.bf16.mxu0 0
    %137 = vmatpush1.bf16.msra.mxu0 %v114
    %138 = vmatprep.subr.bf16.mxu0 0
    %139 = vmatpush1.bf16.msra.mxu0 %v115
    %140 = vmatprep.subr.bf16.mxu0 0
    %141 = vmatpush1.bf16.msra.mxu0 0
    %142 = vmatprep.subr.bf16.mxu0 0
    %143 = vmatpush1.bf16.msra.mxu0 0
    %144 = vmatprep.subr.bf16.mxu0 0
    %145 = vmatpush1.bf16.msra.mxu0 0
    %146 = vmatprep.subr.bf16.mxu0 0
    %147 = vmatpush1.bf16.msra.mxu0 0
    %148 = vmatprep.subr.bf16.mxu0 0
    %149 = vmatpush1.bf16.msra.mxu0 0
    %150 = vmatprep.subr.bf16.mxu0 0
    %151 = vmatpush1.bf16.msra.mxu0 0
    %152 = vmatprep.subr.bf16.mxu0 0
    %153 = vmatpush1.bf16.msra.mxu0 0
    %154 = vmatprep.subr.bf16.mxu0 0
    %155 = vmatpush1.bf16.msra.mxu0 0
    %156 = vmatprep.mubr.bf16.mxu0 0
    %157 = vmatmul.mubr.bf16.gmra.mrb[0].mxu0 %v72
    %v158 = vpop.f32.mrb[0].mxu0
    %v159 = vadd.f32 0.0, %v158
    %v160 = vpop.f32.mrb[0].mxu0
    %v161 = vpop.f32.mrb[0].mxu0
    %v162 = vadd.f32 0.0, %v161
    %v163 = vpop.f32.mrb[0].mxu0
    %164 = vmatprep.mubr.bf16.mxu0 0
    %165 = vmatmul.mubr.bf16.gmra.mrb[0].mxu0 %v73
    %v166 = vpop.f32.mrb[0].mxu0
    %v167 = vadd.f32 0.0, %v166
    %v168 = vpop.f32.mrb[0].mxu0
    %v169 = vpop.f32.mrb[0].mxu0
    %v170 = vadd.f32 0.0, %v169
    %v171 = vpop.f32.mrb[0].mxu0
    %172 = vdwg.mxu0
    %v173 = vpack.c.bf16 %v162, %v159
    %v174 = vpack.c.bf16 %v170, %v167
    %v179 = vunpack.c.l.b16 %v44
    %v180 = vunpack.c.l.b16 %v45
    %v181 = vunpack.c.l.b16 %v46
    %v182 = vunpack.c.l.b16 %v47
    %v183 = vpack.c.b16 %v180, %v179
    %v184 = vpack.c.b16 %v182, %v181
    %vm185 = vcmask 261120
    %v187 = vsel %vm185, %v183, 0
    %v190 = vsel %vm185, %v184, 0
    %192 = vmatprep.subr.bf16.mxu0 0
    %193 = vmatpush1.bf16.msra.mxu0 %v173
    %194 = vmatprep.subr.bf16.mxu0 0
    %195 = vmatpush1.bf16.msra.mxu0 %v174
    %196 = vmatprep.subr.bf16.mxu0 0
    %197 = vmatpush1.bf16.msra.mxu0 0
    %198 = vmatprep.subr.bf16.mxu0 0
    %199 = vmatpush1.bf16.msra.mxu0 0
    %200 = vmatprep.subr.bf16.mxu0 0
    %201 = vmatpush1.bf16.msra.mxu0 0
    %202 = vmatprep.subr.bf16.mxu0 0
    %203 = vmatpush1.bf16.msra.mxu0 0
    %204 = vmatprep.subr.bf16.mxu0 0
    %205 = vmatpush1.bf16.msra.mxu0 0
    %206 = vmatprep.subr.bf16.mxu0 0
    %207 = vmatpush1.bf16.msra.mxu0 0
    %208 = vmatprep.subr.bf16.mxu0 0
    %209 = vmatpush1.bf16.msra.mxu0 0
    %210 = vmatprep.subr.bf16.mxu0 0
    %211 = vmatpush1.bf16.msra.mxu0 0
    %212 = vmatprep.subr.bf16.mxu0 0
    %213 = vmatpush1.bf16.msra.mxu0 0
    %214 = vmatprep.subr.bf16.mxu0 0
    %215 = vmatpush1.bf16.msra.mxu0 0
    %216 = vmatprep.subr.bf16.mxu0 0
    %217 = vmatpush1.bf16.msra.mxu0 0
    %218 = vmatprep.subr.bf16.mxu0 0
    %219 = vmatpush1.bf16.msra.mxu0 0
    %220 = vmatprep.subr.bf16.mxu0 0
    %221 = vmatpush1.bf16.msra.mxu0 0
    %222 = vmatprep.subr.bf16.mxu0 0
    %223 = vmatpush1.bf16.msra.mxu0 0
    %224 = vmatprep.mubr.bf16.mxu0 0
    %225 = vmatmul.mubr.bf16.gmra.mrb[0].mxu0 %v187
    %v226 = vpop.f32.mrb[0].mxu0
    %v227 = vadd.f32 0.0, %v226
    %v228 = vpop.f32.mrb[0].mxu0
    %v229 = vpop.f32.mrb[0].mxu0
    %v230 = vadd.f32 0.0, %v229
    %v231 = vpop.f32.mrb[0].mxu0
    %232 = vmatprep.mubr.bf16.mxu0 0
    %233 = vmatmul.mubr.bf16.gmra.mrb[0].mxu0 %v190
    %v234 = vpop.f32.mrb[0].mxu0
    %v235 = vadd.f32 0.0, %v234
    %v236 = vpop.f32.mrb[0].mxu0
    %v237 = vpop.f32.mrb[0].mxu0
    %v238 = vadd.f32 0.0, %v237
    %v239 = vpop.f32.mrb[0].mxu0
    %240 = vdwg.mxu0
    %v241 = vmax.f32 %v227, 0.0
    %v242 = vmax.f32 %v230, 0.0
    %v243 = vmax.f32 %v235, 0.0
    %v244 = vmax.f32 %v238, 0.0
    %v245 = vpack.c.bf16 %v242, %v241
    %v246 = vpack.c.bf16 %v244, %v243
    %v247 = vld [vmem:[%s4] sm:$0xf]
    %v248 = vld [vmem:[%s4 + $0x4] sm:$0xf]
    %v249 = vld [vmem:[%s4 + $0x8] sm:$0xf]
    %v250 = vld [vmem:[%s4 + $0xc] sm:$0xf]
    %v251 = vld [vmem:[%s4 + $0x10] sm:$0xf]
    %v252 = vld [vmem:[%s4 + $0x14] sm:$0xf]
    %v253 = vld [vmem:[%s4 + $0x18] sm:$0xf]
    %v254 = vld [vmem:[%s4 + $0x1c] sm:$0xf]
    %v255 = vld [vmem:[%s4 + $0x20] sm:$0xf]
    %v256 = vld [vmem:[%s4 + $0x24] sm:$0xf]
    %v257 = vld [vmem:[%s4 + $0x28] sm:$0xf]
    %v258 = vld [vmem:[%s4 + $0x2c] sm:$0xf]
    %v259 = vld [vmem:[%s4 + $0x30] sm:$0xf]
    %v260 = vld [vmem:[%s4 + $0x34] sm:$0xf]
    %v261 = vld [vmem:[%s4 + $0x38] sm:$0xf]
    %v262 = vld [vmem:[%s4 + $0x3c] sm:$0xf]
    %v279 = vunpack.c.l.b16 %v247
    %v280 = vunpack.c.l.b16 %v248
    %v281 = vunpack.c.l.b16 %v249
    %v282 = vunpack.c.l.b16 %v250
    %v283 = vunpack.c.l.b16 %v251
    %v284 = vunpack.c.l.b16 %v252
    %v285 = vunpack.c.l.b16 %v253
    %v286 = vunpack.c.l.b16 %v254
    %v287 = vunpack.c.l.b16 %v255
    %v288 = vunpack.c.l.b16 %v256
    %v289 = vunpack.c.l.b16 %v257
    %v290 = vunpack.c.l.b16 %v258
    %v291 = vunpack.c.l.b16 %v259
    %v292 = vunpack.c.l.b16 %v260
    %v293 = vunpack.c.l.b16 %v261
    %v294 = vunpack.c.l.b16 %v262
    %v295 = vpack.c.b16 %v280, %v279
    %v296 = vpack.c.b16 %v282, %v281
    %v297 = vpack.c.b16 %v284, %v283
    %v298 = vpack.c.b16 %v286, %v285
    %v299 = vpack.c.b16 %v288, %v287
    %v300 = vpack.c.b16 %v290, %v289
    %v301 = vpack.c.b16 %v292, %v291
    %v302 = vpack.c.b16 %v294, %v293
    %311 = vmatprep.subr.bf16.mxu0 0
    %312 = vmatpush1.bf16.msra.mxu0 %v295
    %313 = vmatprep.subr.bf16.mxu0 0
    %314 = vmatpush1.bf16.msra.mxu0 %v296
    %315 = vmatprep.subr.bf16.mxu0 0
    %316 = vmatpush1.bf16.msra.mxu0 %v297
    %317 = vmatprep.subr.bf16.mxu0 0
    %318 = vmatpush1.bf16.msra.mxu0 %v298
    %319 = vmatprep.subr.bf16.mxu0 0
    %320 = vmatpush1.bf16.msra.mxu0 %v299
    %321 = vmatprep.subr.bf16.mxu0 0
    %322 = vmatpush1.bf16.msra.mxu0 %v300
    %323 = vmatprep.subr.bf16.mxu0 0
    %324 = vmatpush1.bf16.msra.mxu0 %v301
    %325 = vmatprep.subr.bf16.mxu0 0
    %326 = vmatpush1.bf16.msra.mxu0 %v302
    %327 = vmatprep.subr.bf16.mxu0 0
    %328 = vmatpush1.bf16.msra.mxu0 0
    %329 = vmatprep.subr.bf16.mxu0 0
    %330 = vmatpush1.bf16.msra.mxu0 0
    %331 = vmatprep.subr.bf16.mxu0 0
    %332 = vmatpush1.bf16.msra.mxu0 0
    %333 = vmatprep.subr.bf16.mxu0 0
    %334 = vmatpush1.bf16.msra.mxu0 0
    %335 = vmatprep.subr.bf16.mxu0 0
    %336 = vmatpush1.bf16.msra.mxu0 0
    %337 = vmatprep.subr.bf16.mxu0 0
    %338 = vmatpush1.bf16.msra.mxu0 0
    %339 = vmatprep.subr.bf16.mxu0 0
    %340 = vmatpush1.bf16.msra.mxu0 0
    %341 = vmatprep.subr.bf16.mxu0 0
    %342 = vmatpush1.bf16.msra.mxu0 0
    %343 = vmatprep.mubr.bf16.mxu0 0
    %344 = vmatmul.mubr.bf16.gmra.mrb[0].mxu0 %v245
    %v345 = vpop.f32.mrb[0].mxu0
    %v346 = vadd.f32 0.0, %v345
    %v347 = vpop.f32.mrb[0].mxu0
    %v348 = vpop.f32.mrb[0].mxu0
    %v349 = vadd.f32 0.0, %v348
    %v350 = vpop.f32.mrb[0].mxu0
    %351 = vmatprep.mubr.bf16.mxu0 0
    %352 = vmatmul.mubr.bf16.gmra.mrb[0].mxu0 %v246
    %v353 = vpop.f32.mrb[0].mxu0
    %v354 = vadd.f32 0.0, %v353
    %v355 = vpop.f32.mrb[0].mxu0
    %v356 = vpop.f32.mrb[0].mxu0
    %v357 = vadd.f32 0.0, %v356
    %v358 = vpop.f32.mrb[0].mxu0
    %359 = vdwg.mxu0
    %v360 = vpack.c.bf16 %v349, %v346
    %v361 = vpack.c.bf16 %v357, %v354
    %362 = vmatprep.subr.bf16.mxu0 0
    %363 = vmatpush1.bf16.msra.mxu0 %v360
    %364 = vmatprep.subr.bf16.mxu0 0
    %365 = vmatpush1.bf16.msra.mxu0 %v361
    %366 = vmatprep.subr.bf16.mxu0 0
    %367 = vmatpush1.bf16.msra.mxu0 0
    %368 = vmatprep.subr.bf16.mxu0 0
    %369 = vmatpush1.bf16.msra.mxu0 0
    %370 = vmatprep.subr.bf16.mxu0 0
    %371 = vmatpush1.bf16.msra.mxu0 0
    %372 = vmatprep.subr.bf16.mxu0 0
    %373 = vmatpush1.bf16.msra.mxu0 0
    %374 = vmatprep.subr.bf16.mxu0 0
    %375 = vmatpush1.bf16.msra.mxu0 0
    %376 = vmatprep.subr.bf16.mxu0 0
    %377 = vmatpush1.bf16.msra.mxu0 0
    %378 = vmatprep.subr.bf16.mxu0 0
    %379 = vmatpush1.bf16.msra.mxu0 0
    %380 = vmatprep.subr.bf16.mxu0 0
    %381 = vmatpush1.bf16.msra.mxu0 0
    %382 = vmatprep.subr.bf16.mxu0 0
    %383 = vmatpush1.bf16.msra.mxu0 0
    %384 = vmatprep.subr.bf16.mxu0 0
    %385 = vmatpush1.bf16.msra.mxu0 0
    %386 = vmatprep.subr.bf16.mxu0 0
    %387 = vmatpush1.bf16.msra.mxu0 0
    %388 = vmatprep.subr.bf16.mxu0 0
    %389 = vmatpush1.bf16.msra.mxu0 0
    %390 = vmatprep.subr.bf16.mxu0 0
    %391 = vmatpush1.bf16.msra.mxu0 0
    %392 = vmatprep.subr.bf16.mxu0 0
    %393 = vmatpush1.bf16.msra.mxu0 0
    %394 = vmatprep.mubr.bf16.mxu0 0
    %395 = vmatmul.mubr.bf16.gmra.mrb[0].mxu0 %v187
    %v396 = vpop.f32.mrb[0].mxu0
    %v397 = vadd.f32 0.0, %v396
    %v398 = vpop.f32.mrb[0].mxu0
    %v399 = vpop.f32.mrb[0].mxu0
    %v400 = vadd.f32 0.0, %v399
    %v401 = vpop.f32.mrb[0].mxu0
    %402 = vmatprep.mubr.bf16.mxu0 0
    %403 = vmatmul.mubr.bf16.gmra.mrb[0].mxu0 %v190
    %v404 = vpop.f32.mrb[0].mxu0
    %v405 = vadd.f32 0.0, %v404
    %v406 = vpop.f32.mrb[0].mxu0
    %v407 = vpop.f32.mrb[0].mxu0
    %v408 = vadd.f32 0.0, %v407
    %v409 = vpop.f32.mrb[0].mxu0
    %410 = vdwg.mxu0
    %v411 = vmax.f32 %v397, 0.0
    %v412 = vmax.f32 %v400, 0.0
    %v413 = vmax.f32 %v405, 0.0
    %v414 = vmax.f32 %v408, 0.0
    %v415 = vstv %s38
    %v416 = vmul.f32 %v415, %v241
    %v417 = vmul.f32 %v415, %v242
    %v418 = vmul.f32 %v415, %v243
    %v419 = vmul.f32 %v415, %v244
    %v420 = vpack.c.bf16 %v412, %v411
    %v421 = vpack.c.bf16 %v414, %v413
    %v422 = vld [vmem:[%s5] sm:$0xf]
    %v423 = vld [vmem:[%s5 + $0x4] sm:$0xf]
    %v424 = vld [vmem:[%s5 + $0x8] sm:$0xf]
    %v425 = vld [vmem:[%s5 + $0xc] sm:$0xf]
    %v426 = vld [vmem:[%s5 + $0x10] sm:$0xf]
    %v427 = vld [vmem:[%s5 + $0x14] sm:$0xf]
    %v428 = vld [vmem:[%s5 + $0x18] sm:$0xf]
    %v429 = vld [vmem:[%s5 + $0x1c] sm:$0xf]
    %v430 = vld [vmem:[%s5 + $0x20] sm:$0xf]
    %v431 = vld [vmem:[%s5 + $0x24] sm:$0xf]
    %v432 = vld [vmem:[%s5 + $0x28] sm:$0xf]
    %v433 = vld [vmem:[%s5 + $0x2c] sm:$0xf]
    %v434 = vld [vmem:[%s5 + $0x30] sm:$0xf]
    %v435 = vld [vmem:[%s5 + $0x34] sm:$0xf]
    %v436 = vld [vmem:[%s5 + $0x38] sm:$0xf]
    %v437 = vld [vmem:[%s5 + $0x3c] sm:$0xf]
    %v454 = vunpack.c.l.b16 %v422
    %v455 = vunpack.c.l.b16 %v423
    %v456 = vunpack.c.l.b16 %v424
    %v457 = vunpack.c.l.b16 %v425
    %v458 = vunpack.c.l.b16 %v426
    %v459 = vunpack.c.l.b16 %v427
    %v460 = vunpack.c.l.b16 %v428
    %v461 = vunpack.c.l.b16 %v429
    %v462 = vunpack.c.l.b16 %v430
    %v463 = vunpack.c.l.b16 %v431
    %v464 = vunpack.c.l.b16 %v432
    %v465 = vunpack.c.l.b16 %v433
    %v466 = vunpack.c.l.b16 %v434
    %v467 = vunpack.c.l.b16 %v435
    %v468 = vunpack.c.l.b16 %v436
    %v469 = vunpack.c.l.b16 %v437
    %v470 = vpack.c.b16 %v455, %v454
    %v471 = vpack.c.b16 %v457, %v456
    %v472 = vpack.c.b16 %v459, %v458
    %v473 = vpack.c.b16 %v461, %v460
    %v474 = vpack.c.b16 %v463, %v462
    %v475 = vpack.c.b16 %v465, %v464
    %v476 = vpack.c.b16 %v467, %v466
    %v477 = vpack.c.b16 %v469, %v468
    %486 = vmatprep.subr.bf16.mxu0 0
    %487 = vmatpush1.bf16.msra.mxu0 %v470
    %488 = vmatprep.subr.bf16.mxu0 0
    %489 = vmatpush1.bf16.msra.mxu0 %v471
    %490 = vmatprep.subr.bf16.mxu0 0
    %491 = vmatpush1.bf16.msra.mxu0 %v472
    %492 = vmatprep.subr.bf16.mxu0 0
    %493 = vmatpush1.bf16.msra.mxu0 %v473
    %494 = vmatprep.subr.bf16.mxu0 0
    %495 = vmatpush1.bf16.msra.mxu0 %v474
    %496 = vmatprep.subr.bf16.mxu0 0
    %497 = vmatpush1.bf16.msra.mxu0 %v475
    %498 = vmatprep.subr.bf16.mxu0 0
    %499 = vmatpush1.bf16.msra.mxu0 %v476
    %500 = vmatprep.subr.bf16.mxu0 0
    %501 = vmatpush1.bf16.msra.mxu0 %v477
    %502 = vmatprep.subr.bf16.mxu0 0
    %503 = vmatpush1.bf16.msra.mxu0 0
    %504 = vmatprep.subr.bf16.mxu0 0
    %505 = vmatpush1.bf16.msra.mxu0 0
    %506 = vmatprep.subr.bf16.mxu0 0
    %507 = vmatpush1.bf16.msra.mxu0 0
    %508 = vmatprep.subr.bf16.mxu0 0
    %509 = vmatpush1.bf16.msra.mxu0 0
    %510 = vmatprep.subr.bf16.mxu0 0
    %511 = vmatpush1.bf16.msra.mxu0 0
    %512 = vmatprep.subr.bf16.mxu0 0
    %513 = vmatpush1.bf16.msra.mxu0 0
    %514 = vmatprep.subr.bf16.mxu0 0
    %515 = vmatpush1.bf16.msra.mxu0 0
    %516 = vmatprep.subr.bf16.mxu0 0
    %517 = vmatpush1.bf16.msra.mxu0 0
    %518 = vmatprep.mubr.bf16.mxu0 0
    %519 = vmatmul.mubr.bf16.gmra.mrb[0].mxu0 %v420
    %v520 = vpop.f32.mrb[0].mxu0
    %v521 = vadd.f32 0.0, %v520
    %v522 = vpop.f32.mrb[0].mxu0
    %v523 = vpop.f32.mrb[0].mxu0
    %v524 = vadd.f32 0.0, %v523
    %v525 = vpop.f32.mrb[0].mxu0
    %526 = vmatprep.mubr.bf16.mxu0 0
    %527 = vmatmul.mubr.bf16.gmra.mrb[0].mxu0 %v421
    %v528 = vpop.f32.mrb[0].mxu0
    %v529 = vadd.f32 0.0, %v528
    %v530 = vpop.f32.mrb[0].mxu0
    %v531 = vpop.f32.mrb[0].mxu0
    %v532 = vadd.f32 0.0, %v531
    %v533 = vpop.f32.mrb[0].mxu0
    %534 = vdwg.mxu0
    %v535 = vstv %s39
    %v536 = vmul.f32 %v535, %v411
    %v537 = vmul.f32 %v535, %v412
    %v538 = vmul.f32 %v535, %v413
    %v539 = vmul.f32 %v535, %v414
    %v540 = vadd.f32 %v416, %v536
    %v541 = vadd.f32 %v417, %v537
    %v542 = vadd.f32 %v418, %v538
    %v543 = vadd.f32 %v419, %v539
    %v544 = vpack.c.bf16 %v524, %v521
    %v545 = vpack.c.bf16 %v532, %v529
    %546 = vmatprep.subr.bf16.mxu0 0
    %547 = vmatpush1.bf16.msra.mxu0 %v544
    %548 = vmatprep.subr.bf16.mxu0 0
    %549 = vmatpush1.bf16.msra.mxu0 %v545
    %550 = vmatprep.subr.bf16.mxu0 0
    %551 = vmatpush1.bf16.msra.mxu0 0
    %552 = vmatprep.subr.bf16.mxu0 0
    %553 = vmatpush1.bf16.msra.mxu0 0
    %554 = vmatprep.subr.bf16.mxu0 0
    %555 = vmatpush1.bf16.msra.mxu0 0
    %556 = vmatprep.subr.bf16.mxu0 0
    %557 = vmatpush1.bf16.msra.mxu0 0
    %558 = vmatprep.subr.bf16.mxu0 0
    %559 = vmatpush1.bf16.msra.mxu0 0
    %560 = vmatprep.subr.bf16.mxu0 0
    %561 = vmatpush1.bf16.msra.mxu0 0
    %562 = vmatprep.subr.bf16.mxu0 0
    %563 = vmatpush1.bf16.msra.mxu0 0
    %564 = vmatprep.subr.bf16.mxu0 0
    %565 = vmatpush1.bf16.msra.mxu0 0
    %566 = vmatprep.subr.bf16.mxu0 0
    %567 = vmatpush1.bf16.msra.mxu0 0
    %568 = vmatprep.subr.bf16.mxu0 0
    %569 = vmatpush1.bf16.msra.mxu0 0
    %570 = vmatprep.subr.bf16.mxu0 0
    %571 = vmatpush1.bf16.msra.mxu0 0
    %572 = vmatprep.subr.bf16.mxu0 0
    %573 = vmatpush1.bf16.msra.mxu0 0
    %574 = vmatprep.subr.bf16.mxu0 0
    %575 = vmatpush1.bf16.msra.mxu0 0
    %576 = vmatprep.subr.bf16.mxu0 0
    %577 = vmatpush1.bf16.msra.mxu0 0
    %578 = vmatprep.mubr.bf16.mxu0 0
    %579 = vmatmul.mubr.bf16.gmra.mrb[0].mxu0 %v187
    %v580 = vpop.f32.mrb[0].mxu0
    %v581 = vadd.f32 0.0, %v580
    %v582 = vpop.f32.mrb[0].mxu0
    %v583 = vpop.f32.mrb[0].mxu0
    %v584 = vadd.f32 0.0, %v583
    %v585 = vpop.f32.mrb[0].mxu0
    %586 = vmatprep.mubr.bf16.mxu0 0
    %587 = vmatmul.mubr.bf16.gmra.mrb[0].mxu0 %v190
    %v588 = vpop.f32.mrb[0].mxu0
    %v589 = vadd.f32 0.0, %v588
    %v590 = vpop.f32.mrb[0].mxu0
    %v591 = vpop.f32.mrb[0].mxu0
    %v592 = vadd.f32 0.0, %v591
    %v593 = vpop.f32.mrb[0].mxu0
    %594 = vdwg.mxu0
    %v595 = vadd.f32 %v540, %v581
    %v596 = vadd.f32 %v541, %v584
    %v597 = vadd.f32 %v542, %v589
    %v598 = vadd.f32 %v543, %v592
    %599 = vst [vmem:[#allocation5] sm:$0xff] %v595
    %600 = vst [vmem:[#allocation5 + $0x8] sm:$0xff] %v596
    %601 = vst [vmem:[#allocation5 + $0x10] sm:$0xff] %v597
    %602 = vst [vmem:[#allocation5 + $0x18] sm:$0xff] %v598
    // Predicated region
    $region30: #{rgcn_forward.1} parent=1 // pred_check
      _
    $region31: #{rgcn_forward.1} parent=1 // pred_check_branch
      %604 = sbr.rel (0) target = $region33
    $region32: #{rgcn_forward.1} parent=1 // pred_region
      %s606 = ssub.s32 512, 512
      %607 = vsyncadd [#allocation3], %s606
      %s608 = sshll.u32 [#allocation5], 4
      %s609 = int_to_ptr.vmem [resolvable:$true] %s608
      %614 = dma.vmem_to_hbm [thread:$0]  %s609, 512, %s6, [#allocation3], 128, 128, 8
    $region33: #{rgcn_forward.1} parent=1 // pred_fallthru
      _
    // Predicated region
    $region34: #{rgcn_forward.1} parent=1 // pred_check
      _
    $region35: #{rgcn_forward.1} parent=1 // pred_check_branch
      %616 = sbr.rel (0) target = $region37
    $region36: #{rgcn_forward.1} parent=1 // pred_region
      %617 = dma.done [#allocation3], 512
    $region37: #{rgcn_forward.1} parent=1 // pred_fallthru
      _
    %618 = vsyncpa [#allocation3], 1
    %619 = vsyncpa [#allocation4], 1

</llo_original>
